<compile_context>
chip_gen: v6e
topology: v6e:2x2x1
jax: 0.10.0
libtpu: 0.0.40
codegen_flags: <defaults>
</compile_context>

<pallas_src>
import functools

import jax
import jax.numpy as jnp
from jax.experimental import pallas as pl
from jax.experimental.pallas import tpu as pltpu


def _round_up(x, m):
    return ((x + m - 1) // m) * m


def _sse_kernel(w_ref, b_ref, x_ref, o_ref, *, use_mxu):
    # w_ref: (C, 1) f32 VMEM (VPU path)  or  (1, C) f32 VMEM (MXU path)
    # b_ref: (1, 1) f32 SMEM             -- conv bias scalar
    # x_ref: (1, C, S_TILE) VMEM         -- input tile
    # o_ref: (1, C, S_TILE) VMEM         -- output tile
    x = x_ref[0]                                              # (C, S_TILE)
    if use_mxu:
        # Large C: one (1,C) x (C,S_TILE) MXU contraction with f32 accumulator.
        # (Weight quantized to x.dtype here; accumulation stays f32.)
        w = w_ref[...].astype(x.dtype)                        # (1, C)
        s = jax.lax.dot_general(
            w, x, (((1,), (0,)), ((), ())),
            preferred_element_type=jnp.float32)               # (1, S_TILE) f32
    else:
        # Small C: per-sublane weight broadcast (VPU) + cross-sublane reduce
        # (XLU) -- avoids an issue-limited M=1 MXU matmul and keeps DMA the
        # binding slot.  Math promotes to f32 via the f32 weight column.
        w_col = w_ref[...]                                    # (C, 1) f32
        s = jnp.sum(x * w_col, axis=0, keepdims=True)         # (1, S_TILE) f32
    # TODO(synk): gate math sits in a (1, S_TILE) layout (1 of 8 sublanes
    # valid), so the EUP sigmoid does ~8x wasted element work; hidden under the
    # DMA window on v5e/v6e, worth sublane-packing if it shows on v7x bundles.
    gate = jax.nn.sigmoid(s + b_ref[0, 0]).astype(x.dtype)    # (1, S_TILE)
    o_ref[0] = x * gate                                       # broadcast over C


def _tpu_vmem_capacity():
    cap = 64 << 20                      # conservative default (v7x per-core VMEM)
    try:
        info = pltpu.get_tpu_info()
        cap = int(getattr(info, "vmem_capacity_bytes", cap))
    except Exception:
        pass
    return cap


def _choose_s_tile(C, S, itemsize, budget_bytes, target_step_bytes, use_mxu):
    """Largest lane-dense (multiple of 128) spatial tile fitting the VMEM budget."""
    sublanes = max(8, 32 // itemsize)          # sublane packing: f32 8, bf16 16, i8 32
    c_pad = _round_up(C, sublanes)
    # Per lane of s_tile: double-buffered input + output blocks (sublane-padded),
    # ~two f32 8-sublane rows for the pre-activation / gate spills, plus (VPU
    # path only) the promoted (C, S_TILE) f32 product before the reduce.
    bytes_per_lane = 4 * c_pad * itemsize + 64
    if not use_mxu:
        bytes_per_lane += _round_up(C, 8) * 4
    s_from_budget = max((budget_bytes // bytes_per_lane) // 128 * 128, 128)
    # Per-step HBM traffic target so the ~0.35 us per-step overhead amortizes.
    s_from_target = _round_up(max(target_step_bytes // (2 * C * itemsize), 128), 128)
    s_cap = _round_up(S, 128)                  # no point exceeding one full row
    return int(min(s_from_budget, s_from_target, s_cap))


def spatial_se_block(x, weight, bias, *, s_tile=None):
    """x: (N, C, D, H, W); weight: (1, C, 1, 1, 1); bias: (1,)  (PyTorch Conv3d 1x1x1)."""
    N, C, D, H, W = x.shape
    S = D * H * W
    itemsize = jnp.dtype(x.dtype).itemsize

    use_mxu = C >= 128                          # M=1 matmul only pays off for large C

    vmem_cap = _tpu_vmem_capacity()
    vmem_limit = int(min((vmem_cap * 3) // 4, 96 << 20))
    # v7x (64 MiB/TC, ~3.2 TB/s): bigger steps to hide grid overhead;
    # v5e/v6e: 8 MiB per step is already >=85% of the HBM roofline.
    target_step_bytes = (16 << 20) if vmem_cap <= (64 << 20) else (8 << 20)

    if s_tile is None:
        s_tile = _choose_s_tile(C, S, itemsize, (vmem_limit * 3) // 4,
                                target_step_bytes, use_mxu)

    x_flat = x.reshape(N, C, S)                 # no padding: edge tile is masked

    if use_mxu:
        w2 = weight.reshape(1, C).astype(jnp.float32)
        w_spec = pl.BlockSpec((1, C), lambda s, n: (0, 0))
    else:
        w2 = weight.reshape(C, 1).astype(jnp.float32)
        w_spec = pl.BlockSpec((C, 1), lambda s, n: (0, 0))
    b2 = bias.reshape(1, 1).astype(jnp.float32)

    num_s_tiles = pl.cdiv(S, s_tile)
    grid = (num_s_tiles, N)                     # long spatial axis first (megacore)

    cost = pl.CostEstimate(
        flops=2 * N * C * S,
        transcendentals=N * S,
        bytes_accessed=2 * N * C * S * itemsize + C * 4 + 4,
    )

    kernel = functools.partial(_sse_kernel, use_mxu=use_mxu)

    out = pl.pallas_call(
        kernel,
        out_shape=jax.ShapeDtypeStruct((N, C, S), x.dtype),
        grid=grid,
        in_specs=[
            w_spec,                                                  # resident weight
            pl.BlockSpec(memory_space=pltpu.MemorySpace.SMEM),       # bias scalar
            pl.BlockSpec((1, C, s_tile), lambda s, n: (n, 0, s)),    # x tile
        ],
        out_specs=pl.BlockSpec((1, C, s_tile), lambda s, n: (n, 0, s)),
        compiler_params=pltpu.CompilerParams(
            dimension_semantics=("parallel", "parallel"),
            vmem_limit_bytes=vmem_limit),
        cost_estimate=cost,
    )(w2, b2, x_flat)

    return out.reshape(N, C, D, H, W)


def _reference(x, weight, bias):
    # Pure-JAX reference of the PyTorch forward (NCDHW, 1x1x1 conv).
    w = weight.reshape(-1)                                   # (C,)
    y = jnp.einsum('ncdhw,c->ndhw', x, w) + bias[0]          # (N, D, H, W)
    y = jax.nn.sigmoid(y)[:, None]                           # (N, 1, D, H, W)
    return x * y


if __name__ == "__main__":
    key = jax.random.PRNGKey(0)
    k_x, k_w, k_b = jax.random.split(key, 3)

    # Deterministic synthetic Conv3d(channels, 1, kernel_size=1) parameters.
    N, C = 2, 4
    weight = jax.random.normal(k_w, (1, C, 1, 1, 1), dtype=jnp.float32) * 0.5
    bias = jax.random.normal(k_b, (1,), dtype=jnp.float32) * 0.1

    # Case 1: spatial size already lane-aligned (D*H*W = 256).
    x1 = jax.random.normal(k_x, (N, C, 4, 8, 8), dtype=jnp.float32)
    out1 = jax.block_until_ready(spatial_se_block(x1, weight, bias))
    ref1 = _reference(x1, weight, bias)
    assert out1.shape == x1.shape
    assert jnp.allclose(out1, ref1, atol=1e-5, rtol=1e-5), "mismatch vs reference (aligned)"

    # Case 2: ragged spatial size (D*H*W = 105) exercises the masked edge tile.
    x2 = jax.random.normal(k_x, (N, C, 3, 5, 7), dtype=jnp.float32)
    out2 = jax.block_until_ready(spatial_se_block(x2, weight, bias))
    ref2 = _reference(x2, weight, bias)
    assert out2.shape == x2.shape
    assert jnp.allclose(out2, ref2, atol=1e-5, rtol=1e-5), "mismatch vs reference (ragged)"

    print("KERNEL_OK")
</pallas_src>

<mosaic_0001>
module attributes {stable_mosaic.version = 11 : i64} {
  func.func @_sse_kernel(%arg0: i32, %arg1: i32, %arg2: memref<4x1xf32, #tpu.memory_space<vmem>>, %arg3: memref<1x1xf32, #tpu.memory_space<smem>>, %arg4: memref<1x4x256xf32, #tpu.memory_space<vmem>>, %arg5: memref<1x4x256xf32, #tpu.memory_space<vmem>>) attributes {dimension_semantics = [#tpu.dimension_semantics<parallel>, #tpu.dimension_semantics<parallel>], iteration_bounds = array<i64: 1, 2>, scalar_prefetch = 0 : i64, scratch_operands = 0 : i64, tpu.core_type = #tpu.core_type<tc>, window_params = [{pipeline_mode = #tpu.pipeline_mode<synchronous>, transform_indices = @transform_0, window_bounds = array<i64: 4, 1>}, {transform_indices = @transform_1, window_bounds = array<i64: 1, 1>}, {transform_indices = @transform_2, window_bounds = array<i64: 1, 4, 256>}, {transform_indices = @transform_3, window_bounds = array<i64: 1, 4, 256>}]} {
    %c0 = arith.constant 0 : index
    %c0_0 = arith.constant 0 : index
    %c0_1 = arith.constant 0 : index
    %0 = vector.load %arg4[%c0, %c0_0, %c0_1] : memref<1x4x256xf32, #tpu.memory_space<vmem>>, vector<1x4x256xf32>
    %1 = vector.shape_cast %0 : vector<1x4x256xf32> to vector<4x256xf32>
    %c0_2 = arith.constant 0 : index
    %c0_3 = arith.constant 0 : index
    %2 = vector.load %arg2[%c0_2, %c0_3] : memref<4x1xf32, #tpu.memory_space<vmem>>, vector<4x1xf32>
    %3 = vector.broadcast %2 : vector<4x1xf32> to vector<4x256xf32>
    %4 = arith.mulf %1, %3 : vector<4x256xf32>
    %cst = arith.constant dense<0.000000e+00> : vector<256xf32>
    %5 = vector.multi_reduction <add>, %4, %cst [0] : vector<4x256xf32> to vector<256xf32>
    %6 = vector.shape_cast %5 : vector<256xf32> to vector<1x256xf32>
    %c0_4 = arith.constant 0 : index
    %c0_5 = arith.constant 0 : index
    %7 = memref.load %arg3[%c0_4, %c0_5] : memref<1x1xf32, #tpu.memory_space<smem>>
    %8 = vector.broadcast %7 : f32 to vector<1x256xf32>
    %9 = arith.addf %6, %8 : vector<1x256xf32>
    %10 = arith.negf %9 : vector<1x256xf32>
    %11 = math.exp %10 : vector<1x256xf32>
    %cst_6 = arith.constant 1.000000e+00 : f32
    %12 = vector.broadcast %cst_6 : f32 to vector<1x256xf32>
    %13 = arith.addf %12, %11 : vector<1x256xf32>
    %14 = arith.divf %12, %13 : vector<1x256xf32>
    %15 = vector.broadcast %14 : vector<1x256xf32> to vector<4x256xf32>
    %16 = arith.mulf %1, %15 : vector<4x256xf32>
    %c0_7 = arith.constant 0 : index
    %c0_8 = arith.constant 0 : index
    %c0_9 = arith.constant 0 : index
    %17 = vector.load %arg5[%c0_7, %c0_8, %c0_9] : memref<1x4x256xf32, #tpu.memory_space<vmem>>, vector<1x4x256xf32>
    %18 = vector.shape_cast %17 : vector<1x4x256xf32> to vector<4x256xf32>
    %19 = vector.shape_cast %16 : vector<4x256xf32> to vector<1x4x256xf32>
    tpu.vector_store %arg5[%c0_7, %c0_8, %c0_9], %19 {strides = array<i32>} : memref<1x4x256xf32, #tpu.memory_space<vmem>>, vector<1x4x256xf32>,
    return
  }
  func.func @transform_0(%arg0: i32, %arg1: i32) -> (i32, i32) {
    %c0_i32 = arith.constant 0 : i32
    %c0_i32_0 = arith.constant 0 : i32
    %c0_i32_1 = arith.constant 0 : i32
    return %c0_i32, %c0_i32_0 : i32, i32
  }
  func.func @transform_1(%arg0: i32, %arg1: i32) -> (i32, i32) {
    %c0_i32 = arith.constant 0 : i32
    %c0_i32_0 = arith.constant 0 : i32
    %c0_i32_1 = arith.constant 0 : i32
    return %c0_i32, %c0_i32_0 : i32, i32
  }
  func.func @transform_2(%arg0: i32, %arg1: i32) -> (i32, i32, i32) {
    %c0_i32 = arith.constant 0 : i32
    %c0_i32_0 = arith.constant 0 : i32
    return %arg1, %c0_i32, %arg0 : i32, i32, i32
  }
  func.func @transform_3(%arg0: i32, %arg1: i32) -> (i32, i32, i32) {
    %c0_i32 = arith.constant 0 : i32
    %c0_i32_0 = arith.constant 0 : i32
    return %arg1, %c0_i32, %arg0 : i32, i32, i32
  }
}

</mosaic_0001>

<llo_original>
// kernel: tpu_custom_call.1
$region0: #{tpu_custom_call.1}
  #allocation0 [shape = 'u32[]', space=smem, size = 0x4, offset = 0x4, fixed_abs, tag = 'smem constant byte address 0x4 - core index']
  #allocation1 [shape = 'u32[144,128]{1,0:T(1,128)}', space=vmem, size = 0x12000, scoped, tag = 'internal scratch']
  #allocation2 [shape = 'f32[1,1]{1,0:T(1,128)S(6)}', space=smem, size = 0x200, scoped, tag = 'scoped memory for tpu_custom_call.1']
  %s0 = inlined_call_operand.vmem [shape: f32[4,1], index: 0, kind: input, shape index: {}]
  %s1 = inlined_call_operand.<no memory space> [shape: f32[1,1], index: 1, kind: input, shape index: {}]
  %s2 = inlined_call_operand.hbm [shape: f32[2,4,256], index: 2, kind: input, shape index: {}]
  %s3 = inlined_call_operand.hbm [shape: f32[2,4,256], index: 3, kind: output, shape index: {}]
  %s4 = sld [smem:[#allocation0]]
  $region49: #{tpu_custom_call.1} parent=0
    _
  %s6 = ssub.s32 1, %s4
  %s7 = scalar_select 0, %s6, %s4
  %8 = sst [smem:[#allocation2]] %s1
  $region1: #{tpu_custom_call.1} parent=0
    #allocation3 [shape = 'u8[8192]{0}', space=vmem, size = 0x2000, scoped, tag = 'input window, operand 2']
    #allocation4 [shape = 's32[2]{0}', space=sflag, size = 0x8, scoped, tag = 'scoped memory for tpu_custom_call.1']
    #allocation5 [shape = 's32[2]{0}', space=sflag, size = 0x8, scoped, tag = 'scoped memory for tpu_custom_call.1']
    #allocation6 [shape = 'u8[8192]{0}', space=vmem, size = 0x2000, scoped, tag = 'output window, operand 0']
    %9 = vsyncpa [#allocation4], 0
    %s10 = scalar_lea.sflag [#allocation4], 1
    %11 = vsyncpa %s10, 0
    %12 = vsyncpa [#allocation5], 0
    %s13 = scalar_lea.sflag [#allocation5], 1
    %14 = vsyncpa %s13, 0
    loop: start=0, step=1, limit=4
    $region2: #{tpu_custom_call.1} parent=1 // loop_pre_header
      _
    $region3: #{tpu_custom_call.1} parent=1 // loop_header
      %s16 = sphi 0, %s20
      %p17 = scmp.ge.s32.totalorder %s16, 4
      %s23 = sphi 0, %s35
      %s24 = sphi 0, %s31
      %s25 = sphi 0, %s23
      %s26 = sphi 0, %s24
      %s27 = sphi 0, %s25
      %s28 = sphi 0, %s26
      %s36 = sphi 0, %s36
      %s38 = sphi 0, %s36
      %s39 = sphi 0, %s38
      %s53 = sphi 0, %s39
      %s57 = sphi 0, %s57
      %s59 = sphi 0, %s57
      %s60 = sphi 0, %s59
      %s74 = sphi 0, %s60
      %s82 = sphi 0, %s84
      %s85 = sphi 0, %s82
      %s86 = sphi 0, %s85
      %s102 = sphi 0, %s86
      %s110 = sphi 0, %s112
      %s113 = sphi 0, %s110
      %s114 = sphi 0, %s113
      %s130 = sphi 0, %s114
    $region4: #{tpu_custom_call.1} parent=1 // loop_header_branch
      %19 = sbr.rel (%p17) target = $region8
    $region5: #{tpu_custom_call.1} parent=1 // loop_body
      %s21 = ssub.s32 %s16, 1
      %s22 = ssub.s32 %s16, 2
      %s29 = sadd.s32 1, %s24
      %p30 = scmp.ge.s32.totalorder %s29, 2
      %s31 = scalar_select %p30, 0, %s29
      %s32 = sadd.s32 1, %s23
      %s33 = scalar_select %p30, %s32, %s23
      %p34 = scmp.ge.s32.totalorder %s33, 1
      %s35 = scalar_select %p34, 0, %s33
      %s37 = sadd.s32 %s36, 1
      %p40 = scmp.eq.s32.totalorder %s16, 1
      %p41 = scmp.ne.s32.totalorder %s36, %s38
      %p42 = scmp.eq.s32.totalorder %s16, 0
      %p43 = por %p41, %p42
      %p44 = scmp.ne.s32.totalorder %s36, %s38
      %p45 = scmp.eq.s32.totalorder %s21, 1
      %p46 = por %p44, %p45
      %p47 = scmp.ne.s32.totalorder %s38, %s39
      %p48 = scmp.eq.s32.totalorder %s21, 0
      %p49 = por %p47, %p48
      %p50 = scmp.ne.s32.totalorder %s38, %s39
      %p51 = scmp.eq.s32.totalorder %s22, 1
      %p52 = por %p50, %p51
      %p54 = scmp.ne.s32.totalorder %s39, %s53
      %p55 = scmp.eq.s32.totalorder %s22, 0
      %p56 = por %p54, %p55
      %s58 = sadd.s32 %s57, 1
      %p61 = scmp.eq.s32.totalorder %s16, 1
      %p62 = scmp.ne.s32.totalorder %s57, %s59
      %p63 = scmp.eq.s32.totalorder %s16, 0
      %p64 = por %p62, %p63
      %p65 = scmp.ne.s32.totalorder %s57, %s59
      %p66 = scmp.eq.s32.totalorder %s21, 1
      %p67 = por %p65, %p66
      %p68 = scmp.ne.s32.totalorder %s59, %s60
      %p69 = scmp.eq.s32.totalorder %s21, 0
      %p70 = por %p68, %p69
      %p71 = scmp.ne.s32.totalorder %s59, %s60
      %p72 = scmp.eq.s32.totalorder %s22, 1
      %p73 = por %p71, %p72
      %p75 = scmp.ne.s32.totalorder %s60, %s74
      %p76 = scmp.eq.s32.totalorder %s22, 0
      %p77 = por %p75, %p76
      %s78 = ssub.s32 %s24, %s31
      %s79 = ssub.s32 %s23, %s35
      %s80 = sor.u32 %s78, %s79
      %p81 = scmp.eq.s32.totalorder %s80, 0
      %s83 = sadd.s32 %s82, 1
      %s84 = scalar_select %p81, %s82, %s83
      %p87 = pneg %p81
      %p88 = scmp.eq.s32.totalorder %s16, 1
      %p89 = por %p87, %p88
      %p90 = scmp.ne.s32.totalorder %s82, %s85
      %p91 = scmp.eq.s32.totalorder %s16, 0
      %p92 = por %p90, %p91
      %p93 = scmp.ne.s32.totalorder %s82, %s85
      %p94 = scmp.eq.s32.totalorder %s21, 1
      %p95 = por %p93, %p94
      %p96 = scmp.ne.s32.totalorder %s85, %s86
      %p97 = scmp.eq.s32.totalorder %s21, 0
      %p98 = por %p96, %p97
      %p99 = scmp.ne.s32.totalorder %s85, %s86
      %p100 = scmp.eq.s32.totalorder %s22, 1
      %p101 = por %p99, %p100
      %p103 = scmp.ne.s32.totalorder %s86, %s102
      %p104 = scmp.eq.s32.totalorder %s22, 0
      %p105 = por %p103, %p104
      %s106 = ssub.s32 %s24, %s31
      %s107 = ssub.s32 %s23, %s35
      %s108 = sor.u32 %s106, %s107
      %p109 = scmp.eq.s32.totalorder %s108, 0
      %s111 = sadd.s32 %s110, 1
      %s112 = scalar_select %p109, %s110, %s111
      %p115 = pneg %p109
      %p116 = scmp.eq.s32.totalorder %s16, 1
      %p117 = por %p115, %p116
      %p118 = scmp.ne.s32.totalorder %s110, %s113
      %p119 = scmp.eq.s32.totalorder %s16, 0
      %p120 = por %p118, %p119
      %p121 = scmp.ne.s32.totalorder %s110, %s113
      %p122 = scmp.eq.s32.totalorder %s21, 1
      %p123 = por %p121, %p122
      %p124 = scmp.ne.s32.totalorder %s113, %s114
      %p125 = scmp.eq.s32.totalorder %s21, 0
      %p126 = por %p124, %p125
      %p127 = scmp.ne.s32.totalorder %s113, %s114
      %p128 = scmp.eq.s32.totalorder %s22, 1
      %p129 = por %p127, %p128
      %p131 = scmp.ne.s32.totalorder %s114, %s130
      %p132 = scmp.eq.s32.totalorder %s22, 0
      %p133 = por %p131, %p132
      %p134 = scmp.le.s32.totalorder 1, %s16
      %p135 = scmp.lt.s32.totalorder %s16, 3
      %p136 = pnand %p134, %p135
      %p137 = pneg %p136
      // Predicated region
      $region9: #{tpu_custom_call.1} parent=5 // pred_check
        _
      $region10: #{tpu_custom_call.1} parent=5 // pred_check_branch
        %139 = sbr.rel (%p136) target = $region12
      $region11: #{tpu_custom_call.1} parent=5 // pred_region
        %s140 = ssub.s32 %s16, 1
        // Predicated region
        $region13: #{tpu_custom_call.1} parent=11 // pred_check
          %p141 = pneg %p49
        $region14: #{tpu_custom_call.1} parent=11 // pred_check_branch
          %143 = sbr.rel (%p141) target = $region16
        $region15: #{tpu_custom_call.1} parent=11 // pred_region
          _
        $region16: #{tpu_custom_call.1} parent=11 // pred_fallthru
          _
        // Predicated region
        $region17: #{tpu_custom_call.1} parent=11 // pred_check
          %p144 = pneg %p70
        $region18: #{tpu_custom_call.1} parent=11 // pred_check_branch
          %146 = sbr.rel (%p144) target = $region20
        $region19: #{tpu_custom_call.1} parent=11 // pred_region
          _
        $region20: #{tpu_custom_call.1} parent=11 // pred_fallthru
          _
      $region12: #{tpu_custom_call.1} parent=5 // pred_fallthru
        _
      %p147 = scmp.lt.s32.totalorder %s16, 2
      // Predicated region
      $region21: #{tpu_custom_call.1} parent=5 // pred_check
        %p148 = pneg %p147
      $region22: #{tpu_custom_call.1} parent=5 // pred_check_branch
        %150 = sbr.rel (%p148) target = $region24
      $region23: #{tpu_custom_call.1} parent=5 // pred_region
        // Predicated region
        $region25: #{tpu_custom_call.1} parent=23 // pred_check
          %p151 = pneg %p92
        $region26: #{tpu_custom_call.1} parent=23 // pred_check_branch
          %153 = sbr.rel (%p151) target = $region28
        $region27: #{tpu_custom_call.1} parent=23 // pred_region
          %s154 = sand.u32 %s82, 1
          %s155 = scalar_lea.sflag [#allocation4], %s154
          %s156 = sand.u32 %s82, 1
          %s157 = smul.addr %s156, 8
          %s158 = scalar_lea.vmem [#allocation3], %s157
          %s159 = smul.u32 2, %s23
          %s161 = ssub.s32 128, 128
          %162 = vsyncadd %s155, %s161
          %s163 = smul.addr %s24, 2
          %s164 = sadd.s32 %s159, %s163
          %s165 = smul.addr %s164, 64
          %s166 = scalar_lea.hbm %s2, %s165
          %s168 = sshll.u32 %s158, 4
          %s169 = int_to_ptr.vmem [resolvable:$true] %s168
          %171 = dma.hbm_to_vmem [thread:$0]  %s166, 128, %s169, %s155
        $region28: #{tpu_custom_call.1} parent=23 // pred_fallthru
          _
      $region24: #{tpu_custom_call.1} parent=5 // pred_fallthru
        _
      %p172 = scmp.le.s32.totalorder 1, %s16
      %p173 = scmp.lt.s32.totalorder %s16, 3
      %p174 = pnand %p172, %p173
      %p175 = pneg %p174
      // Predicated region
      $region29: #{tpu_custom_call.1} parent=5 // pred_check
        _
      $region30: #{tpu_custom_call.1} parent=5 // pred_check_branch
        %177 = sbr.rel (%p174) target = $region32
      $region31: #{tpu_custom_call.1} parent=5 // pred_region
        %s178 = ssub.s32 %s16, 1
        %s179 = sand.u32 %s85, 1
        %s180 = scalar_lea.sflag [#allocation4], %s179
        %s181 = sand.u32 %s85, 1
        %s182 = smul.addr %s181, 8
        %s183 = scalar_lea.vmem [#allocation3], %s182
        // Predicated region
        $region33: #{tpu_custom_call.1} parent=31 // pred_check
          %p184 = pneg %p98
        $region34: #{tpu_custom_call.1} parent=31 // pred_check_branch
          %186 = sbr.rel (%p184) target = $region36
        $region35: #{tpu_custom_call.1} parent=31 // pred_region
          %187 = dma.done %s180, 128
        $region36: #{tpu_custom_call.1} parent=31 // pred_fallthru
          _
        %p188 = pneg %p49
        %p189 = pneg %p46
        %p190 = pneg %p70
        %p191 = pneg %p67
        %s192 = sand.u32 %s85, 1
        %s193 = scalar_lea.sflag [#allocation4], %s192
        %s194 = sand.u32 %s85, 1
        %s195 = smul.addr %s194, 8
        %s196 = scalar_lea.vmem [#allocation3], %s195
        %p197 = pneg %p98
        %p198 = pneg %p95
        %p199 = pneg %p126
        %p200 = pneg %p123
        %s201 = sand.u32 %s113, 1
        %s202 = scalar_lea.sflag [#allocation5], %s201
        %s203 = sand.u32 %s113, 1
        %s204 = smul.addr %s203, 8
        %s205 = scalar_lea.vmem [#allocation6], %s204
        %s206 = smul.u32 2, %s25
        %s207 = smul.u32 2, %s25
        %v208 = vld [vmem:[%s183] sm:$0xff]
        %v209 = vld [vmem:[%s0] sm:$0xf]
        %211 = vset.pattern.permute.xlu0 0
        %212 = vperm.xlu0 %211, %v209
        %v213 = vpop.permute.xlu0 %212
        %v215 = vunpack.c.l.s4 839922192
        %v216 = vunpack.c.0.s8 %v215
        %v217 = vlaneseq
        %v218 = vshrl.u32 %v217, 7
        %v219 = vsub.s32 %v216, %v218
        %v220 = vrot.slane %v213, %v219
        %v222 = vmul.f32 %v208, %v220
        %v224 = vcombine.high %v222, %v222
        %vm226 = vcmask 1043456
        %v227 = vsel %vm226, %v222, 0.0
        %v228 = vrot.slane %v227, 4
        %v229 = vadd.f32 %v227, %v228
        %v230 = vrot.slane %v229, 2
        %v231 = vadd.f32 %v229, %v230
        %v232 = vrot.slane %v231, 1
        %v233 = vadd.f32 %v231, %v232
        %v234 = vsel %vm226, %v224, 0.0
        %v235 = vrot.slane %v234, 4
        %v236 = vadd.f32 %v234, %v235
        %v237 = vrot.slane %v236, 2
        %v238 = vadd.f32 %v236, %v237
        %v239 = vrot.slane %v238, 1
        %v240 = vadd.f32 %v238, %v239
        %s241 = sld [smem:[#allocation2]]
        %v242 = vstv %s241
        %v243 = vadd.f32 %v233, %v242
        %v244 = vadd.f32 %v240, %v242
        %v245 = vxor.u32 %v243, 2147483648
        %v246 = vxor.u32 %v244, 2147483648
        %v247 = vmul.f32 %v245, 1.442695
        %v248 = vpow.pop %v247
        %v249 = vmul.f32 %v246, 1.442695
        %v250 = vpow.pop %v249
        %v251 = vadd.f32 %v248, 1.0
        %v252 = vadd.f32 %v250, 1.0
        %v253 = vrcp.pop %v251
        %v254 = vmul.f32 1.0, %v253
        %v255 = vrcp.pop %v252
        %v256 = vmul.f32 1.0, %v255
        %v259 = vcombine.low %v254, %v256
        %v261 = vmul.f32 %v208, %v259
        %262 = vst [vmem:[%s205] sm:$0xff] %v261
        %s263 = sand.u32 %s113, 1
        %s264 = scalar_lea.sflag [#allocation5], %s263
        %s265 = sand.u32 %s113, 1
        %s266 = smul.addr %s265, 8
        %s267 = scalar_lea.vmem [#allocation6], %s266
        // Predicated region
        $region37: #{tpu_custom_call.1} parent=31 // pred_check
          %p268 = pneg %p123
        $region38: #{tpu_custom_call.1} parent=31 // pred_check_branch
          %270 = sbr.rel (%p268) target = $region40
        $region39: #{tpu_custom_call.1} parent=31 // pred_region
          %s271 = smul.u32 2, %s25
          %s273 = ssub.s32 128, 128
          %274 = vsyncadd %s264, %s273
          %s275 = smul.addr %s26, 2
          %s276 = sadd.s32 %s271, %s275
          %s277 = smul.addr %s276, 64
          %s278 = scalar_lea.hbm %s3, %s277
          %s280 = sshll.u32 %s267, 4
          %s281 = int_to_ptr.vmem [resolvable:$true] %s280
          %283 = dma.vmem_to_hbm [thread:$0]  %s281, 128, %s278, %s264
        $region40: #{tpu_custom_call.1} parent=31 // pred_fallthru
          _
      $region32: #{tpu_custom_call.1} parent=5 // pred_fallthru
        _
      %p284 = scmp.le.s32.totalorder 2, %s16
      // Predicated region
      $region41: #{tpu_custom_call.1} parent=5 // pred_check
        %p285 = pneg %p284
      $region42: #{tpu_custom_call.1} parent=5 // pred_check_branch
        %287 = sbr.rel (%p285) target = $region44
      $region43: #{tpu_custom_call.1} parent=5 // pred_region
        %s288 = ssub.s32 %s16, 2
        // Predicated region
        $region45: #{tpu_custom_call.1} parent=43 // pred_check
          %p289 = pneg %p129
        $region46: #{tpu_custom_call.1} parent=43 // pred_check_branch
          %291 = sbr.rel (%p289) target = $region48
        $region47: #{tpu_custom_call.1} parent=43 // pred_region
          %s292 = sand.u32 %s114, 1
          %s293 = scalar_lea.sflag [#allocation5], %s292
          %s294 = sand.u32 %s114, 1
          %s295 = smul.addr %s294, 8
          %s296 = scalar_lea.vmem [#allocation6], %s295
          %297 = dma.done %s293, 128
        $region48: #{tpu_custom_call.1} parent=43 // pred_fallthru
          _
      $region44: #{tpu_custom_call.1} parent=5 // pred_fallthru
        _
    $region6: #{tpu_custom_call.1} parent=1 // loop_footer
      %s20 = sadd.s32 1, %s16
    $region7: #{tpu_custom_call.1} parent=1 // loop_footer_branch
      %15 = sbr.rel target = $region3
    $region8: #{tpu_custom_call.1} parent=1 // loop_exit
      _
    %298 = vsyncpa [#allocation4], 1
    %s299 = scalar_lea.sflag [#allocation4], 1
    %300 = vsyncpa %s299, 1
    %301 = vsyncpa [#allocation5], 1
    %s302 = scalar_lea.sflag [#allocation5], 1
    %303 = vsyncpa %s302, 1

</llo_original>
